<compile_context>
chip_gen: v7x
topology: tpu7x:2x2x1
jax: 0.10.0
libtpu: 0.0.40
codegen_flags: <defaults>
</compile_context>

<pallas_src>
import jax
import jax.numpy as jnp
from jax.experimental import pallas as pl
from jax.experimental.pallas import tpu as pltpu

_LANES = 128
_SUBLANES = 8
_MIN_BLOCK_B = _LANES * _SUBLANES        # 1024: smallest fully (8,128)-dense tile
_MAX_BLOCK_B = 2048 * _LANES             # 256K batch elems / step (~3 MiB f32 in+out)


def _make_xor_kernel(in_dim, hidden_dim, out_dim):
    """Fully unrolled VPU kernel for the tiny MLP (no MXU, no matmul)."""
    w1_off = 0
    b1_off = w1_off + hidden_dim * in_dim
    w2_off = b1_off + hidden_dim
    b2_off = w2_off + out_dim * hidden_dim

    def kernel(p_ref, x_ref, o_ref):
        # x_ref: (in_dim, rows, 128), o_ref: (out_dim, rows, 128) — batch packed
        # dense into both the sublane (rows) and lane (128) axes.
        # Hoist all scalar parameter reads (SMEM) off the critical path.
        w1 = [[p_ref[w1_off + j * in_dim + k] for k in range(in_dim)]
              for j in range(hidden_dim)]
        b1 = [p_ref[b1_off + j] for j in range(hidden_dim)]
        w2 = [[p_ref[w2_off + m * hidden_dim + j] for j in range(hidden_dim)]
              for m in range(out_dim)]
        b2 = [p_ref[b2_off + m] for m in range(out_dim)]

        xs = [x_ref[k] for k in range(in_dim)]            # each (rows, 128), dense

        # lin1 + sigmoid:  h_j = 1 / (1 + exp(-(sum_k W1[j,k] x_k + b1[j])))
        hs = []
        for j in range(hidden_dim):
            s = xs[0] * w1[j][0]
            for k in range(1, in_dim):
                s = s + xs[k] * w1[j][k]
            s = s + b1[j]
            # exp + approximate reciprocal both run on the EUP slot (VALU-free).
            hs.append(pl.reciprocal(1.0 + jnp.exp(-s), approx=True))

        # lin2:  o_m = sum_j W2[m,j] h_j + b2[m]
        for m in range(out_dim):
            s = hs[0] * w2[m][0]
            for j in range(1, hidden_dim):
                s = s + hs[j] * w2[m][j]
            o_ref[m] = s + b2[m]

    return kernel


def xor_forward(x, w1, b1, w2, b2, *, block_b=None):
    """Pallas forward pass.

    Params use PyTorch nn.Linear layout: w1 (hidden, in), b1 (hidden,),
    w2 (out, hidden), b2 (out,).  x: (B, in_dim) f32 -> (B, out_dim) f32.
    """
    B, in_dim = x.shape
    hidden_dim = w1.shape[0]
    out_dim = w2.shape[0]

    # Pack every parameter into one flat SMEM-resident array (single tiny copy).
    # TODO(synk): could also be routed via PrefetchScalarGridSpec(num_scalar_prefetch=1);
    # functionally identical here since params never drive index maps.
    params = jnp.concatenate(
        [w1.reshape(-1), b1.reshape(-1), w2.reshape(-1), b2.reshape(-1)]
    ).astype(jnp.float32)

    if block_b is None:
        block_b = min(_MAX_BLOCK_B, _MIN_BLOCK_B * pl.cdiv(B, _MIN_BLOCK_B))
    assert block_b % _MIN_BLOCK_B == 0, "block_b must be a multiple of 8*128"
    b_pad = block_b * pl.cdiv(B, block_b)
    block_rows = block_b // _LANES
    n_rows = b_pad // _LANES

    # Single layout chain (cast -> transpose -> pad -> sublane/lane repack); XLA
    # fuses this into one copy.  Batch index b maps to (row, lane) = (b//128, b%128).
    x3 = jnp.pad(
        x.astype(jnp.float32).T, ((0, 0), (0, b_pad - B))
    ).reshape(in_dim, n_rows, _LANES)

    kernel = _make_xor_kernel(in_dim, hidden_dim, out_dim)

    out3 = pl.pallas_call(
        kernel,
        out_shape=jax.ShapeDtypeStruct((out_dim, n_rows, _LANES), jnp.float32),
        grid=(b_pad // block_b,),
        in_specs=[
            pl.BlockSpec(memory_space=pltpu.MemorySpace.SMEM),   # packed params
            pl.BlockSpec((in_dim, block_rows, _LANES), lambda i: (0, i, 0)),
        ],
        out_specs=pl.BlockSpec((out_dim, block_rows, _LANES), lambda i: (0, i, 0)),
        compiler_params=pltpu.CompilerParams(
            # Batch tiles are independent -> megacore split on v7x; double-buffered
            # tiles (~6 MiB) stay well under every chip's scoped-VMEM default.
            dimension_semantics=("parallel",),
        ),
    )(params, x3)

    out_flat = out3.reshape(out_dim, b_pad)
    if out_dim == 1:
        return out_flat.reshape(b_pad, 1)[:B]     # pure reshape, no transpose pass
    return out_flat[:, :B].T


def init_params(key, input_dim=2, hidden_dim=2, output_dim=1):
    """Deterministic init mirroring nn.Linear default U(-1/sqrt(fan_in), 1/sqrt(fan_in))."""
    k1, k2, k3, k4 = jax.random.split(key, 4)
    bound1 = 1.0 / jnp.sqrt(jnp.float32(input_dim))
    bound2 = 1.0 / jnp.sqrt(jnp.float32(hidden_dim))
    w1 = jax.random.uniform(k1, (hidden_dim, input_dim), jnp.float32, -bound1, bound1)
    b1 = jax.random.uniform(k2, (hidden_dim,), jnp.float32, -bound1, bound1)
    w2 = jax.random.uniform(k3, (output_dim, hidden_dim), jnp.float32, -bound2, bound2)
    b2 = jax.random.uniform(k4, (output_dim,), jnp.float32, -bound2, bound2)
    return w1, b1, w2, b2


def xor_forward_ref(x, w1, b1, w2, b2):
    """Pure-JAX reference (exact nn.Linear semantics: x @ W.T + b)."""
    h = jax.nn.sigmoid(x @ w1.T + b1)
    return h @ w2.T + b2


if __name__ == "__main__":
    key = jax.random.PRNGKey(0)
    k_params, k_x = jax.random.split(key)

    input_dim, output_dim, batch = 2, 1, 8
    w1, b1, w2, b2 = init_params(k_params, input_dim=input_dim, output_dim=output_dim)

    # Small deterministic XOR-style inputs.
    x = jax.random.uniform(k_x, (batch, input_dim), jnp.float32)
    out = xor_forward(x, w1, b1, w2, b2)
    jax.block_until_ready(out)
    ref = xor_forward_ref(x, w1, b1, w2, b2)
    assert out.shape == (batch, output_dim)
    # Tolerance covers the EUP approximate-reciprocal sigmoid (~bf16-level error).
    assert jnp.allclose(out, ref, atol=2e-3, rtol=2e-3), float(jnp.max(jnp.abs(out - ref)))

    # Multi-tile grid + sublane/lane padding path: 3000 batch, 1024-element tiles.
    x2 = jax.random.uniform(jax.random.PRNGKey(1), (3000, input_dim), jnp.float32)
    out2 = xor_forward(x2, w1, b1, w2, b2, block_b=1024)
    jax.block_until_ready(out2)
    ref2 = xor_forward_ref(x2, w1, b1, w2, b2)
    assert out2.shape == (3000, output_dim)
    assert jnp.allclose(out2, ref2, atol=2e-3, rtol=2e-3), float(jnp.max(jnp.abs(out2 - ref2)))

    print("KERNEL_OK")
</pallas_src>

<mosaic_0001>
module attributes {stable_mosaic.version = 11 : i64} {
  func.func @kernel(%arg0: i32, %arg1: memref<9xf32, #tpu.memory_space<smem>>, %arg2: memref<2x8x128xf32, #tpu.memory_space<vmem>>, %arg3: memref<1x8x128xf32, #tpu.memory_space<vmem>>) attributes {dimension_semantics = [#tpu.dimension_semantics<parallel>], iteration_bounds = array<i64: 1>, scalar_prefetch = 0 : i64, scratch_operands = 0 : i64, tpu.core_type = #tpu.core_type<tc>, window_params = [{transform_indices = @transform_0, window_bounds = array<i64: 9>}, {transform_indices = @transform_1, window_bounds = array<i64: 2, 8, 128>}, {transform_indices = @transform_2, window_bounds = array<i64: 1, 8, 128>}]} {
    %c0 = arith.constant 0 : index
    %0 = memref.load %arg1[%c0] : memref<9xf32, #tpu.memory_space<smem>>
    %c1 = arith.constant 1 : index
    %1 = memref.load %arg1[%c1] : memref<9xf32, #tpu.memory_space<smem>>
    %c2 = arith.constant 2 : index
    %2 = memref.load %arg1[%c2] : memref<9xf32, #tpu.memory_space<smem>>
    %c3 = arith.constant 3 : index
    %3 = memref.load %arg1[%c3] : memref<9xf32, #tpu.memory_space<smem>>
    %c4 = arith.constant 4 : index
    %4 = memref.load %arg1[%c4] : memref<9xf32, #tpu.memory_space<smem>>
    %c5 = arith.constant 5 : index
    %5 = memref.load %arg1[%c5] : memref<9xf32, #tpu.memory_space<smem>>
    %c6 = arith.constant 6 : index
    %6 = memref.load %arg1[%c6] : memref<9xf32, #tpu.memory_space<smem>>
    %c7 = arith.constant 7 : index
    %7 = memref.load %arg1[%c7] : memref<9xf32, #tpu.memory_space<smem>>
    %c8 = arith.constant 8 : index
    %8 = memref.load %arg1[%c8] : memref<9xf32, #tpu.memory_space<smem>>
    %c0_0 = arith.constant 0 : index
    %c0_1 = arith.constant 0 : index
    %c0_2 = arith.constant 0 : index
    %9 = vector.load %arg2[%c0_0, %c0_1, %c0_2] : memref<2x8x128xf32, #tpu.memory_space<vmem>>, vector<1x8x128xf32>
    %10 = vector.shape_cast %9 : vector<1x8x128xf32> to vector<8x128xf32>
    %c1_3 = arith.constant 1 : index
    %c0_4 = arith.constant 0 : index
    %c0_5 = arith.constant 0 : index
    %11 = vector.load %arg2[%c1_3, %c0_4, %c0_5] : memref<2x8x128xf32, #tpu.memory_space<vmem>>, vector<1x8x128xf32>
    %12 = vector.shape_cast %11 : vector<1x8x128xf32> to vector<8x128xf32>
    %13 = vector.broadcast %0 : f32 to vector<8x128xf32>
    %14 = arith.mulf %10, %13 : vector<8x128xf32>
    %15 = vector.broadcast %1 : f32 to vector<8x128xf32>
    %16 = arith.mulf %12, %15 : vector<8x128xf32>
    %17 = arith.addf %14, %16 : vector<8x128xf32>
    %18 = vector.broadcast %4 : f32 to vector<8x128xf32>
    %19 = arith.addf %17, %18 : vector<8x128xf32>
    %cst = arith.constant 0.000000e+00 : f32
    %20 = vector.broadcast %cst : f32 to vector<8x128xf32>
    %21 = arith.subf %20, %19 : vector<8x128xf32>
    %22 = math.exp %21 : vector<8x128xf32>
    %cst_6 = arith.constant 1.000000e+00 : f32
    %23 = vector.broadcast %cst_6 : f32 to vector<8x128xf32>
    %24 = arith.addf %23, %22 : vector<8x128xf32>
    %25 = tpu.reciprocal %24 {approx = true} : vector<8x128xf32> -> vector<8x128xf32>
    %26 = vector.broadcast %2 : f32 to vector<8x128xf32>
    %27 = arith.mulf %10, %26 : vector<8x128xf32>
    %28 = vector.broadcast %3 : f32 to vector<8x128xf32>
    %29 = arith.mulf %12, %28 : vector<8x128xf32>
    %30 = arith.addf %27, %29 : vector<8x128xf32>
    %31 = vector.broadcast %5 : f32 to vector<8x128xf32>
    %32 = arith.addf %30, %31 : vector<8x128xf32>
    %cst_7 = arith.constant 0.000000e+00 : f32
    %33 = vector.broadcast %cst_7 : f32 to vector<8x128xf32>
    %34 = arith.subf %33, %32 : vector<8x128xf32>
    %35 = math.exp %34 : vector<8x128xf32>
    %cst_8 = arith.constant 1.000000e+00 : f32
    %36 = vector.broadcast %cst_8 : f32 to vector<8x128xf32>
    %37 = arith.addf %36, %35 : vector<8x128xf32>
    %38 = tpu.reciprocal %37 {approx = true} : vector<8x128xf32> -> vector<8x128xf32>
    %39 = vector.broadcast %6 : f32 to vector<8x128xf32>
    %40 = arith.mulf %25, %39 : vector<8x128xf32>
    %41 = vector.broadcast %7 : f32 to vector<8x128xf32>
    %42 = arith.mulf %38, %41 : vector<8x128xf32>
    %43 = arith.addf %40, %42 : vector<8x128xf32>
    %44 = vector.broadcast %8 : f32 to vector<8x128xf32>
    %45 = arith.addf %43, %44 : vector<8x128xf32>
    %c0_9 = arith.constant 0 : index
    %c0_10 = arith.constant 0 : index
    %c0_11 = arith.constant 0 : index
    %46 = vector.load %arg3[%c0_9, %c0_10, %c0_11] : memref<1x8x128xf32, #tpu.memory_space<vmem>>, vector<1x8x128xf32>
    %47 = vector.shape_cast %46 : vector<1x8x128xf32> to vector<8x128xf32>
    %48 = vector.shape_cast %45 : vector<8x128xf32> to vector<1x8x128xf32>
    tpu.vector_store %arg3[%c0_9, %c0_10, %c0_11], %48 {strides = array<i32>} : memref<1x8x128xf32, #tpu.memory_space<vmem>>, vector<1x8x128xf32>,
    return
  }
  func.func @transform_0(%arg0: i32) -> i32 {
    %c0_i32 = arith.constant 0 : i32
    %c0_i32_0 = arith.constant 0 : i32
    return %c0_i32 : i32
  }
  func.func @transform_1(%arg0: i32) -> (i32, i32, i32) {
    %c0_i32 = arith.constant 0 : i32
    %c0_i32_0 = arith.constant 0 : i32
    %c0_i32_1 = arith.constant 0 : i32
    return %c0_i32, %arg0, %c0_i32_0 : i32, i32, i32
  }
  func.func @transform_2(%arg0: i32) -> (i32, i32, i32) {
    %c0_i32 = arith.constant 0 : i32
    %c0_i32_0 = arith.constant 0 : i32
    %c0_i32_1 = arith.constant 0 : i32
    return %c0_i32, %arg0, %c0_i32_0 : i32, i32, i32
  }
}

</mosaic_0001>

<llo_original>
// kernel: tpu_custom_call.1
$region0: #{tpu_custom_call.1}
  #allocation0 [shape = 'u32[]', space=smem, size = 0x4, offset = 0x4, fixed_abs, tag = 'smem constant byte address 0x4 - core index']
  #allocation1 [shape = 'u32[144,128]{1,0:T(1,128)}', space=vmem, size = 0x12000, scoped, tag = 'internal scratch']
  %s0 = inlined_call_operand.hbm [shape: f32[9], index: 0, kind: input, shape index: {}]
  %s1 = inlined_call_operand.hbm [shape: f32[2,8,128], index: 1, kind: input, shape index: {}]
  %s2 = inlined_call_operand.hbm [shape: f32[1,8,128], index: 2, kind: output, shape index: {}]
  %s3 = sld [smem:[#allocation0]]
  $region26: #{tpu_custom_call.1} parent=0
    _
  %s5 = ssub.s32 1, %s3
  %s6 = scalar_select 0, %s5, %s3
  $region1: #{tpu_custom_call.1} parent=0
    #allocation2 [shape = 'u8[512]{0}', space=smem, size = 0x200, scoped, tag = 'input window, operand 0, single buffered']
    #allocation3 [shape = 's32[1]{0}', space=sflag, size = 0x4, scoped, tag = 'scoped memory for tpu_custom_call.1']
    #allocation4 [shape = 's32[1]{0}', space=sflag, size = 0x4, scoped, tag = 'scoped memory for tpu_custom_call.1']
    #allocation5 [shape = 's32[1]{0}', space=sflag, size = 0x4, scoped, tag = 'scoped memory for tpu_custom_call.1']
    #allocation6 [shape = 'u8[8192]{0}', space=vmem, size = 0x2000, scoped, tag = 'input window, operand 1, single buffered']
    #allocation7 [shape = 'u8[4096]{0}', space=vmem, size = 0x1000, scoped, tag = 'output window, operand 0, single buffered']
    %7 = vsyncpa [#allocation5], 0
    %8 = vsyncpa [#allocation3], 0
    %9 = vsyncpa [#allocation4], 0
    // Predicated region
    $region2: #{tpu_custom_call.1} parent=1 // pred_check
      _
    $region3: #{tpu_custom_call.1} parent=1 // pred_check_branch
      %11 = sbr.rel (0) target = $region5
    $region4: #{tpu_custom_call.1} parent=1 // pred_region
      %s13 = ssub.s32 16, 16
      %14 = vsyncadd [#allocation5], %s13
      %17 = dma.hbm_to_smem %s0, 16, [#allocation2], [#allocation5]
    $region5: #{tpu_custom_call.1} parent=1 // pred_fallthru
      _
    // Predicated region
    $region6: #{tpu_custom_call.1} parent=1 // pred_check
      _
    $region7: #{tpu_custom_call.1} parent=1 // pred_check_branch
      %19 = sbr.rel (0) target = $region9
    $region8: #{tpu_custom_call.1} parent=1 // pred_region
      %s21 = ssub.s32 256, 256
      %22 = vsyncadd [#allocation3], %s21
      %s23 = sshll.u32 [#allocation6], 4
      %s24 = int_to_ptr.vmem [resolvable:$true] %s23
      %29 = dma.hbm_to_vmem [thread:$0]  %s1, 256, %s24, [#allocation3], 128, 128, 8
    $region9: #{tpu_custom_call.1} parent=1 // pred_fallthru
      _
    // Predicated region
    $region10: #{tpu_custom_call.1} parent=1 // pred_check
      _
    $region11: #{tpu_custom_call.1} parent=1 // pred_check_branch
      %31 = sbr.rel (0) target = $region13
    $region12: #{tpu_custom_call.1} parent=1 // pred_region
      %32 = dma.done [#allocation5], 16
    $region13: #{tpu_custom_call.1} parent=1 // pred_fallthru
      _
    // Predicated region
    $region14: #{tpu_custom_call.1} parent=1 // pred_check
      _
    $region15: #{tpu_custom_call.1} parent=1 // pred_check_branch
      %34 = sbr.rel (0) target = $region17
    $region16: #{tpu_custom_call.1} parent=1 // pred_region
      %35 = dma.done [#allocation3], 256
    $region17: #{tpu_custom_call.1} parent=1 // pred_fallthru
      _
    %36 = sfence
    %s37 = sld [smem:[#allocation2]]
    %s38 = sld [smem:[#allocation2 + $0x1]]
    %s39 = sld [smem:[#allocation2 + $0x2]]
    %s40 = sld [smem:[#allocation2 + $0x3]]
    %s41 = sld [smem:[#allocation2 + $0x4]]
    %s42 = sld [smem:[#allocation2 + $0x5]]
    %s43 = sld [smem:[#allocation2 + $0x6]]
    %s44 = sld [smem:[#allocation2 + $0x7]]
    %s45 = sld [smem:[#allocation2 + $0x8]]
    %v46 = vld [vmem:[#allocation6] sm:$0xff]
    %s47 = scalar_lea.vmem [#allocation6], 8
    %v48 = vld [vmem:[%s47] sm:$0xff]
    %v49 = vstv %s37
    %v50 = vmul.f32 %v46, %v49
    %v51 = vstv %s38
    %v52 = vmul.f32 %v48, %v51
    %v53 = vadd.f32 %v50, %v52
    %v54 = vstv %s41
    %v55 = vadd.f32 %v53, %v54
    %v56 = vsub.f32 0.0, %v55
    %v57 = vmul.f32 %v56, 1.442695
    %v58 = vpow.pop %v57
    %v59 = vadd.f32 %v58, 1.0
    %v60 = vrcp.pop %v59
    %v61 = vstv %s39
    %v62 = vmul.f32 %v46, %v61
    %v63 = vstv %s40
    %v64 = vmul.f32 %v48, %v63
    %v65 = vadd.f32 %v62, %v64
    %v66 = vstv %s42
    %v67 = vadd.f32 %v65, %v66
    %v68 = vsub.f32 0.0, %v67
    %v69 = vmul.f32 %v68, 1.442695
    %v70 = vpow.pop %v69
    %v71 = vadd.f32 %v70, 1.0
    %v72 = vrcp.pop %v71
    %v73 = vstv %s43
    %v74 = vmul.f32 %v60, %v73
    %v75 = vstv %s44
    %v76 = vmul.f32 %v72, %v75
    %v77 = vadd.f32 %v74, %v76
    %v78 = vstv %s45
    %v79 = vadd.f32 %v77, %v78
    %80 = vst [vmem:[#allocation7] sm:$0xff] %v79
    // Predicated region
    $region18: #{tpu_custom_call.1} parent=1 // pred_check
      _
    $region19: #{tpu_custom_call.1} parent=1 // pred_check_branch
      %82 = sbr.rel (0) target = $region21
    $region20: #{tpu_custom_call.1} parent=1 // pred_region
      %s84 = ssub.s32 128, 128
      %85 = vsyncadd [#allocation4], %s84
      %s87 = sshll.u32 [#allocation7], 4
      %s88 = int_to_ptr.vmem [resolvable:$true] %s87
      %90 = dma.vmem_to_hbm [thread:$0]  %s88, 128, %s2, [#allocation4]
    $region21: #{tpu_custom_call.1} parent=1 // pred_fallthru
      _
    // Predicated region
    $region22: #{tpu_custom_call.1} parent=1 // pred_check
      _
    $region23: #{tpu_custom_call.1} parent=1 // pred_check_branch
      %92 = sbr.rel (0) target = $region25
    $region24: #{tpu_custom_call.1} parent=1 // pred_region
      %93 = dma.done [#allocation4], 128
    $region25: #{tpu_custom_call.1} parent=1 // pred_fallthru
      _
    %94 = vsyncpa [#allocation3], 1
    %95 = vsyncpa [#allocation4], 1
    %96 = vsyncpa [#allocation5], 1

</llo_original>
